<compile_context>
chip_gen: v7x
topology: tpu7x:2x2x1
jax: 0.10.0
libtpu: 0.0.40
codegen_flags: <defaults>
</compile_context>

<pallas_src>
import math

import jax
import jax.numpy as jnp
from jax.experimental import pallas as pl
from jax.experimental.pallas import tpu as pltpu  # noqa: F401  (TPU backend assumed)

D_MODEL = 8       # d_model
SEQ_LEN = 8       # seq_len (small test size)
STATE_SIZE = 16   # state_size (small test size)
BATCH = 2
EPS = 1e-5


def mamba_block_kernel(
    x_ref, rms_w_ref,
    in_d_w_ref, in_d_b_ref,      # fused [inp_proj | D] : (d, 2*dd), (1, 2*dd)
    m_l_ref, m_r_ref,            # host-built feature-shift matrices (dd, dd)
    conv_w_ref, conv_b_ref,      # block-diag-over-batch conv: (BL, 3*BL), (BL, 1)
    clin_w_ref, clin_b_ref,      # conv_linear: (dd, dd), (1, dd)
    s6_w_ref, s6_b_ref,          # fused [fc1 | fc2 | fc3]: (dd, dd+2N), (1, dd+2N)
    out_w_ref, out_b_ref,        # out_proj: (dd, d), (1, d)
    o_ref,                       # (BL, d)
):
    f32 = jnp.float32
    x = x_ref[...]                           # (BL, d)
    dd = clin_w_ref.shape[0]                 # 2 * d_model
    n_state = (s6_w_ref.shape[1] - dd) // 2  # state_size

    # ---- RMSNorm (over the d features of every (batch, seq) row) ----
    ms = jnp.mean(x * x, axis=-1, keepdims=True)
    xn = x * jax.lax.rsqrt(ms + EPS) * rms_w_ref[...]                     # (BL, d)

    # ---- fused inp_proj | D projection ----
    proj = jnp.dot(xn, in_d_w_ref[...], preferred_element_type=f32) + in_d_b_ref[...]  # (BL, 2*dd)
    x_proj = proj[:, :dd]                                                 # (BL, dd)
    x_res = jax.nn.silu(proj[:, dd:])                                     # (BL, dd)

    # ---- Conv1d(seq_len -> seq_len, k=3, pad=1) ----
    # Conv length = feature axis, channels = seq positions.  Feature +/-1 shifts
    # are done with host-precomputed 0/1 matrices (stays on the MXU); the three
    # taps collapse into one matmul against the block-diagonal conv weight.
    x_lm = jnp.dot(x_proj, m_l_ref[...], preferred_element_type=f32)      # feature f <- f-1
    x_rm = jnp.dot(x_proj, m_r_ref[...], preferred_element_type=f32)      # feature f <- f+1
    x_stack = jnp.concatenate([x_lm, x_proj, x_rm], axis=0)               # (3*BL, dd)
    x_conv = (jnp.dot(conv_w_ref[...], x_stack, preferred_element_type=f32)
              + conv_b_ref[...])                                          # (BL, dd)

    x_conv_out = (jnp.dot(jax.nn.silu(x_conv), clin_w_ref[...],
                          preferred_element_type=f32) + clin_b_ref[...])  # (BL, dd)

    # ---- S6 (fused fc1 | fc2 | fc3) ----
    dbc = jnp.dot(x_conv_out, s6_w_ref[...], preferred_element_type=f32) + s6_b_ref[...]
    delta = jax.nn.softplus(dbc[:, :dd])                                  # (BL, dd)
    b_mat = dbc[:, dd:dd + n_state]                                       # (BL, N)
    c_mat = dbc[:, dd + n_state:]                                         # (BL, N)
    # In the reference forward, h is freshly zero-initialized, so dA*h == 0 and
    #   y[l, d] = x[l, d] * delta[l, d] * sum_n C[l, n] * B[l, n]
    # (the dA = exp(delta A) term never contributes; A is therefore not needed).
    cb = jnp.sum(c_mat * b_mat, axis=-1, keepdims=True)                   # (BL, 1)
    x_ssm = x_conv_out * delta * cb                                       # (BL, dd)

    # ---- gating + output projection ----
    x_comb = jax.nn.silu(x_ssm) * x_res
    o_ref[...] = (jnp.dot(x_comb, out_w_ref[...], preferred_element_type=f32)
                  + out_b_ref[...])                                       # (BL, d)


@jax.jit
def mamba_block(x, p):
    B, L, d = x.shape
    dd = 2 * d
    BL = B * L
    f32 = jnp.float32

    x2d = x.reshape(BL, d)

    # ---- host-side fused / hoisted constants (tiny; folded under jit) ----
    in_d_w = jnp.concatenate([p["inp_w"], p["d_w"]], axis=1)              # (d, 2*dd)
    in_d_b = jnp.concatenate([p["inp_b"], p["d_b"]], axis=1)              # (1, 2*dd)

    idx = jnp.arange(dd)
    m_left = (idx[:, None] + 1 == idx[None, :]).astype(f32)   # X @ m_left : f <- f-1 (zero front)
    m_right = (idx[:, None] == idx[None, :] + 1).astype(f32)  # X @ m_right: f <- f+1 (zero back)

    eye_b = jnp.eye(B, dtype=f32)
    conv_w_bd = jnp.concatenate(
        [jnp.kron(eye_b, p["conv_w"][k]) for k in range(3)], axis=1)      # (BL, 3*BL)
    conv_b_bd = jnp.tile(p["conv_b"], (B, 1))                             # (BL, 1)

    s6_w = jnp.concatenate([p["fc1_w"], p["fc2_w"], p["fc3_w"]], axis=1)  # (dd, dd+2N)
    s6_b = jnp.concatenate([p["fc1_b"], p["fc2_b"], p["fc3_b"]], axis=1)  # (1, dd+2N)

    out2d = pl.pallas_call(
        mamba_block_kernel,
        out_shape=jax.ShapeDtypeStruct((BL, d), f32),
    )(x2d, p["rms_w"], in_d_w, in_d_b, m_left, m_right,
      conv_w_bd, conv_b_bd, p["clin_w"], p["clin_b"],
      s6_w, s6_b, p["out_w"], p["out_b"])

    return out2d.reshape(B, L, d)


def init_params(key, d, L, N):
    """Deterministic synthetic parameters (shapes match the PyTorch module)."""
    dd = 2 * d
    ks = jax.random.split(key, 12)

    def lin(k, fan_in, shape):
        bound = 1.0 / math.sqrt(fan_in)
        return jax.random.uniform(k, shape, jnp.float32, -bound, bound)

    p = {}
    p["rms_w"] = jnp.ones((1, d), jnp.float32)                       # RMSNorm weight = ones
    p["inp_w"] = lin(ks[0], d, (d, dd))
    p["inp_b"] = lin(ks[0], d, (1, dd))
    p["conv_w"] = lin(ks[1], L * 3, (3, L, L))                       # (k, out_ch, in_ch)
    p["conv_b"] = lin(ks[2], L * 3, (L, 1))
    p["clin_w"] = lin(ks[3], dd, (dd, dd))
    p["clin_b"] = lin(ks[3], dd, (1, dd))
    p["fc1_w"] = lin(ks[4], dd, (dd, dd))
    p["fc1_b"] = lin(ks[4], dd, (1, dd))
    p["fc2_w"] = lin(ks[5], dd, (dd, N))
    p["fc2_b"] = lin(ks[5], dd, (1, N))
    p["fc3_w"] = lin(ks[6], dd, (dd, N))
    p["fc3_b"] = lin(ks[6], dd, (1, N))
    # S6.A (xavier uniform) — only enters through dA, which multiplies a zero
    # hidden state in the reference forward, so it never affects the output.
    a_bound = math.sqrt(6.0 / (dd + N))
    p["A"] = jax.random.uniform(ks[7], (dd, N), jnp.float32, -a_bound, a_bound)
    p["d_w"] = lin(ks[8], d, (d, dd))
    p["d_b"] = lin(ks[8], d, (1, dd))
    p["out_w"] = lin(ks[9], dd, (dd, d))
    p["out_b"] = jnp.ones((1, d), jnp.float32)                       # out_proj bias = 1.0
    return p


def ref_forward(x, p):
    """Pure-JAX reference replicating MambaBlock.forward semantics."""
    ms = jnp.mean(x * x, axis=-1, keepdims=True)
    xn = x * jax.lax.rsqrt(ms + EPS) * p["rms_w"][0]
    x_proj = xn @ p["inp_w"] + p["inp_b"][0]                          # (B, L, dd)
    xp = jnp.pad(x_proj, ((0, 0), (0, 0), (1, 1)))
    w = p["conv_w"]
    x_conv = (jnp.einsum("oi,bif->bof", w[0], xp[:, :, :-2])
              + jnp.einsum("oi,bif->bof", w[1], xp[:, :, 1:-1])
              + jnp.einsum("oi,bif->bof", w[2], xp[:, :, 2:])
              + p["conv_b"][None, :, :])
    x_conv_act = jax.nn.silu(x_conv)
    x_conv_out = x_conv_act @ p["clin_w"] + p["clin_b"][0]
    b_m = x_conv_out @ p["fc2_w"] + p["fc2_b"][0]
    c_m = x_conv_out @ p["fc3_w"] + p["fc3_b"][0]
    delta = jax.nn.softplus(x_conv_out @ p["fc1_w"] + p["fc1_b"][0])
    cb = jnp.sum(c_m * b_m, axis=-1, keepdims=True)
    x_ssm = x_conv_out * delta * cb
    x_act = jax.nn.silu(x_ssm)
    x_res = jax.nn.silu(xn @ p["d_w"] + p["d_b"][0])
    return (x_act * x_res) @ p["out_w"] + p["out_b"][0]


if __name__ == "__main__":
    key = jax.random.PRNGKey(0)
    kx, kp = jax.random.split(key)
    x = jax.random.normal(kx, (BATCH, SEQ_LEN, D_MODEL), jnp.float32)
    params = init_params(kp, D_MODEL, SEQ_LEN, STATE_SIZE)

    out = mamba_block(x, params)
    out = jax.block_until_ready(out)

    ref = ref_forward(x, params)
    assert out.shape == (BATCH, SEQ_LEN, D_MODEL)
    assert jnp.all(jnp.isfinite(out))
    assert jnp.allclose(out, ref, rtol=1e-2, atol=1e-2), (
        f"max abs diff {jnp.max(jnp.abs(out - ref))}")
    print("KERNEL_OK")
</pallas_src>

<mosaic_0001>
module attributes {stable_mosaic.version = 11 : i64} {
  func.func @mamba_block_kernel(%arg0: memref<16x8xf32, #tpu.memory_space<vmem>>, %arg1: memref<1x8xf32, #tpu.memory_space<vmem>>, %arg2: memref<8x32xf32, #tpu.memory_space<vmem>>, %arg3: memref<1x32xf32, #tpu.memory_space<vmem>>, %arg4: memref<16x16xf32, #tpu.memory_space<vmem>>, %arg5: memref<16x16xf32, #tpu.memory_space<vmem>>, %arg6: memref<16x48xf32, #tpu.memory_space<vmem>>, %arg7: memref<16x1xf32, #tpu.memory_space<vmem>>, %arg8: memref<16x16xf32, #tpu.memory_space<vmem>>, %arg9: memref<1x16xf32, #tpu.memory_space<vmem>>, %arg10: memref<16x48xf32, #tpu.memory_space<vmem>>, %arg11: memref<1x48xf32, #tpu.memory_space<vmem>>, %arg12: memref<16x8xf32, #tpu.memory_space<vmem>>, %arg13: memref<1x8xf32, #tpu.memory_space<vmem>>, %arg14: memref<16x8xf32, #tpu.memory_space<vmem>>) attributes {dimension_semantics = [], scalar_prefetch = 0 : i64, scratch_operands = 0 : i64, tpu.core_type = #tpu.core_type<tc>} {
    %c0 = arith.constant 0 : index
    %c0_0 = arith.constant 0 : index
    %0 = vector.load %arg0[%c0, %c0_0] : memref<16x8xf32, #tpu.memory_space<vmem>>, vector<16x8xf32>
    %1 = arith.mulf %0, %0 : vector<16x8xf32>
    %cst = arith.constant dense<0.000000e+00> : vector<16xf32>
    %2 = vector.multi_reduction <add>, %1, %cst [1] : vector<16x8xf32> to vector<16xf32>
    %3 = vector.shape_cast %2 : vector<16xf32> to vector<16x1xf32>
    %cst_1 = arith.constant 8.000000e+00 : f32
    %4 = vector.broadcast %cst_1 : f32 to vector<16x1xf32>
    %5 = arith.divf %3, %4 : vector<16x1xf32>
    %cst_2 = arith.constant 9.99999974E-6 : f32
    %6 = vector.broadcast %cst_2 : f32 to vector<16x1xf32>
    %7 = arith.addf %5, %6 : vector<16x1xf32>
    %8 = math.rsqrt %7 : vector<16x1xf32>
    %9 = vector.broadcast %8 : vector<16x1xf32> to vector<16x8xf32>
    %10 = arith.mulf %0, %9 : vector<16x8xf32>
    %c0_3 = arith.constant 0 : index
    %c0_4 = arith.constant 0 : index
    %11 = vector.load %arg1[%c0_3, %c0_4] : memref<1x8xf32, #tpu.memory_space<vmem>>, vector<1x8xf32>
    %12 = vector.broadcast %11 : vector<1x8xf32> to vector<16x8xf32>
    %13 = arith.mulf %10, %12 : vector<16x8xf32>
    %c0_5 = arith.constant 0 : index
    %c0_6 = arith.constant 0 : index
    %14 = vector.load %arg2[%c0_5, %c0_6] : memref<8x32xf32, #tpu.memory_space<vmem>>, vector<8x32xf32>
    %cst_7 = arith.constant dense<0.000000e+00> : vector<16x32xf32>
    %15 = tpu.matmul %13, %14, %cst_7 {dimension_numbers = #tpu.dot_dimension_numbers<[1], [0], [0], [1], [0, 0, 1, 1], [], []>} : vector<16x8xf32>, vector<8x32xf32>, vector<16x32xf32> -> vector<16x32xf32>
    %c0_8 = arith.constant 0 : index
    %c0_9 = arith.constant 0 : index
    %16 = vector.load %arg3[%c0_8, %c0_9] : memref<1x32xf32, #tpu.memory_space<vmem>>, vector<1x32xf32>
    %17 = vector.broadcast %16 : vector<1x32xf32> to vector<16x32xf32>
    %18 = arith.addf %15, %17 : vector<16x32xf32>
    %19 = vector.extract_strided_slice %18 {offsets = [0, 0], sizes = [16, 16], strides = [1, 1]} : vector<16x32xf32> to vector<16x16xf32>
    %20 = vector.extract_strided_slice %18 {offsets = [0, 16], sizes = [16, 16], strides = [1, 1]} : vector<16x32xf32> to vector<16x16xf32>
    %21 = arith.negf %20 : vector<16x16xf32>
    %22 = math.exp %21 : vector<16x16xf32>
    %cst_10 = arith.constant 1.000000e+00 : f32
    %23 = vector.broadcast %cst_10 : f32 to vector<16x16xf32>
    %24 = arith.addf %23, %22 : vector<16x16xf32>
    %25 = arith.divf %23, %24 : vector<16x16xf32>
    %26 = arith.mulf %20, %25 : vector<16x16xf32>
    %c0_11 = arith.constant 0 : index
    %c0_12 = arith.constant 0 : index
    %27 = vector.load %arg4[%c0_11, %c0_12] : memref<16x16xf32, #tpu.memory_space<vmem>>, vector<16x16xf32>
    %cst_13 = arith.constant dense<0.000000e+00> : vector<16x16xf32>
    %28 = tpu.matmul %19, %27, %cst_13 {dimension_numbers = #tpu.dot_dimension_numbers<[1], [0], [0], [1], [0, 0, 1, 1], [], []>} : vector<16x16xf32>, vector<16x16xf32>, vector<16x16xf32> -> vector<16x16xf32>
    %c0_14 = arith.constant 0 : index
    %c0_15 = arith.constant 0 : index
    %29 = vector.load %arg5[%c0_14, %c0_15] : memref<16x16xf32, #tpu.memory_space<vmem>>, vector<16x16xf32>
    %cst_16 = arith.constant dense<0.000000e+00> : vector<16x16xf32>
    %30 = tpu.matmul %19, %29, %cst_16 {dimension_numbers = #tpu.dot_dimension_numbers<[1], [0], [0], [1], [0, 0, 1, 1], [], []>} : vector<16x16xf32>, vector<16x16xf32>, vector<16x16xf32> -> vector<16x16xf32>
    %31 = tpu.concatenate %28, %19, %30 in 0 : vector<16x16xf32>, vector<16x16xf32>, vector<16x16xf32> -> vector<48x16xf32>
    %c0_17 = arith.constant 0 : index
    %c0_18 = arith.constant 0 : index
    %32 = vector.load %arg6[%c0_17, %c0_18] : memref<16x48xf32, #tpu.memory_space<vmem>>, vector<16x48xf32>
    %cst_19 = arith.constant dense<0.000000e+00> : vector<16x16xf32>
    %33 = tpu.matmul %32, %31, %cst_19 {dimension_numbers = #tpu.dot_dimension_numbers<[1], [0], [0], [1], [0, 0, 1, 1], [], []>} : vector<16x48xf32>, vector<48x16xf32>, vector<16x16xf32> -> vector<16x16xf32>
    %c0_20 = arith.constant 0 : index
    %c0_21 = arith.constant 0 : index
    %34 = vector.load %arg7[%c0_20, %c0_21] : memref<16x1xf32, #tpu.memory_space<vmem>>, vector<16x1xf32>
    %35 = vector.broadcast %34 : vector<16x1xf32> to vector<16x16xf32>
    %36 = arith.addf %33, %35 : vector<16x16xf32>
    %37 = arith.negf %36 : vector<16x16xf32>
    %38 = math.exp %37 : vector<16x16xf32>
    %cst_22 = arith.constant 1.000000e+00 : f32
    %39 = vector.broadcast %cst_22 : f32 to vector<16x16xf32>
    %40 = arith.addf %39, %38 : vector<16x16xf32>
    %41 = arith.divf %39, %40 : vector<16x16xf32>
    %42 = arith.mulf %36, %41 : vector<16x16xf32>
    %c0_23 = arith.constant 0 : index
    %c0_24 = arith.constant 0 : index
    %43 = vector.load %arg8[%c0_23, %c0_24] : memref<16x16xf32, #tpu.memory_space<vmem>>, vector<16x16xf32>
    %cst_25 = arith.constant dense<0.000000e+00> : vector<16x16xf32>
    %44 = tpu.matmul %42, %43, %cst_25 {dimension_numbers = #tpu.dot_dimension_numbers<[1], [0], [0], [1], [0, 0, 1, 1], [], []>} : vector<16x16xf32>, vector<16x16xf32>, vector<16x16xf32> -> vector<16x16xf32>
    %c0_26 = arith.constant 0 : index
    %c0_27 = arith.constant 0 : index
    %45 = vector.load %arg9[%c0_26, %c0_27] : memref<1x16xf32, #tpu.memory_space<vmem>>, vector<1x16xf32>
    %46 = vector.broadcast %45 : vector<1x16xf32> to vector<16x16xf32>
    %47 = arith.addf %44, %46 : vector<16x16xf32>
    %c0_28 = arith.constant 0 : index
    %c0_29 = arith.constant 0 : index
    %48 = vector.load %arg10[%c0_28, %c0_29] : memref<16x48xf32, #tpu.memory_space<vmem>>, vector<16x48xf32>
    %cst_30 = arith.constant dense<0.000000e+00> : vector<16x48xf32>
    %49 = tpu.matmul %47, %48, %cst_30 {dimension_numbers = #tpu.dot_dimension_numbers<[1], [0], [0], [1], [0, 0, 1, 1], [], []>} : vector<16x16xf32>, vector<16x48xf32>, vector<16x48xf32> -> vector<16x48xf32>
    %c0_31 = arith.constant 0 : index
    %c0_32 = arith.constant 0 : index
    %50 = vector.load %arg11[%c0_31, %c0_32] : memref<1x48xf32, #tpu.memory_space<vmem>>, vector<1x48xf32>
    %51 = vector.broadcast %50 : vector<1x48xf32> to vector<16x48xf32>
    %52 = arith.addf %49, %51 : vector<16x48xf32>
    %53 = vector.extract_strided_slice %52 {offsets = [0, 0], sizes = [16, 16], strides = [1, 1]} : vector<16x48xf32> to vector<16x16xf32>
    %cst_33 = arith.constant 0.000000e+00 : f32
    %54 = vector.broadcast %cst_33 : f32 to vector<16x16xf32>
    %55 = arith.maximumf %53, %54 : vector<16x16xf32>
    %56 = vector.broadcast %cst_33 : f32 to vector<16x16xf32>
    %57 = arith.subf %53, %56 : vector<16x16xf32>
    %58 = arith.cmpf one, %57, %57 : vector<16x16xf32>
    %59 = vector.broadcast %cst_33 : f32 to vector<16x16xf32>
    %60 = arith.addf %53, %59 : vector<16x16xf32>
    %61 = math.absf %57 : vector<16x16xf32>
    %cst_34 = arith.constant 0.000000e+00 : f32
    %62 = vector.broadcast %cst_34 : f32 to vector<16x16xf32>
    %63 = arith.subf %62, %61 : vector<16x16xf32>
    %64 = math.exp %63 : vector<16x16xf32>
    %65 = math.log1p %64 : vector<16x16xf32>
    %66 = arith.addf %55, %65 : vector<16x16xf32>
    %67 = arith.select %58, %60, %66 : vector<16x16xi1>, vector<16x16xf32>
    %68 = vector.extract_strided_slice %52 {offsets = [0, 16], sizes = [16, 16], strides = [1, 1]} : vector<16x48xf32> to vector<16x16xf32>
    %69 = vector.extract_strided_slice %52 {offsets = [0, 32], sizes = [16, 16], strides = [1, 1]} : vector<16x48xf32> to vector<16x16xf32>
    %70 = arith.mulf %69, %68 : vector<16x16xf32>
    %cst_35 = arith.constant dense<0.000000e+00> : vector<16xf32>
    %71 = vector.multi_reduction <add>, %70, %cst_35 [1] : vector<16x16xf32> to vector<16xf32>
    %72 = vector.shape_cast %71 : vector<16xf32> to vector<16x1xf32>
    %73 = arith.mulf %47, %67 : vector<16x16xf32>
    %74 = vector.broadcast %72 : vector<16x1xf32> to vector<16x16xf32>
    %75 = arith.mulf %73, %74 : vector<16x16xf32>
    %76 = arith.negf %75 : vector<16x16xf32>
    %77 = math.exp %76 : vector<16x16xf32>
    %cst_36 = arith.constant 1.000000e+00 : f32
    %78 = vector.broadcast %cst_36 : f32 to vector<16x16xf32>
    %79 = arith.addf %78, %77 : vector<16x16xf32>
    %80 = arith.divf %78, %79 : vector<16x16xf32>
    %81 = arith.mulf %75, %80 : vector<16x16xf32>
    %82 = arith.mulf %81, %26 : vector<16x16xf32>
    %c0_37 = arith.constant 0 : index
    %c0_38 = arith.constant 0 : index
    %83 = vector.load %arg12[%c0_37, %c0_38] : memref<16x8xf32, #tpu.memory_space<vmem>>, vector<16x8xf32>
    %cst_39 = arith.constant dense<0.000000e+00> : vector<16x8xf32>
    %84 = tpu.matmul %82, %83, %cst_39 {dimension_numbers = #tpu.dot_dimension_numbers<[1], [0], [0], [1], [0, 0, 1, 1], [], []>} : vector<16x16xf32>, vector<16x8xf32>, vector<16x8xf32> -> vector<16x8xf32>
    %c0_40 = arith.constant 0 : index
    %c0_41 = arith.constant 0 : index
    %85 = vector.load %arg13[%c0_40, %c0_41] : memref<1x8xf32, #tpu.memory_space<vmem>>, vector<1x8xf32>
    %86 = vector.broadcast %85 : vector<1x8xf32> to vector<16x8xf32>
    %87 = arith.addf %84, %86 : vector<16x8xf32>
    %c0_42 = arith.constant 0 : index
    %c0_43 = arith.constant 0 : index
    %88 = vector.load %arg14[%c0_42, %c0_43] : memref<16x8xf32, #tpu.memory_space<vmem>>, vector<16x8xf32>
    tpu.vector_store %arg14[%c0_42, %c0_43], %87 {strides = array<i32>} : memref<16x8xf32, #tpu.memory_space<vmem>>, vector<16x8xf32>,
    return
  }
}

</mosaic_0001>

<llo_original>
// kernel: mamba_block.1
$region0: #{mamba_block.1}
  #allocation0 [shape = 'u32[]', space=smem, size = 0x4, offset = 0x4, fixed_abs, tag = 'smem constant byte address 0x4 - core index']
  #allocation1 [shape = 'u32[144,128]{1,0:T(1,128)}', space=vmem, size = 0x12000, scoped, tag = 'internal scratch']
  %s0 = inlined_call_operand.vmem [shape: f32[16,8], index: 0, kind: input, shape index: {}]
  %s1 = inlined_call_operand.vmem [shape: f32[1,8], index: 1, kind: input, shape index: {}]
  %s2 = inlined_call_operand.vmem [shape: f32[8,32], index: 2, kind: input, shape index: {}]
  %s3 = inlined_call_operand.vmem [shape: f32[1,32], index: 3, kind: input, shape index: {}]
  %s4 = inlined_call_operand.vmem [shape: f32[16,16], index: 4, kind: input, shape index: {}]
  %s5 = inlined_call_operand.vmem [shape: f32[16,16], index: 5, kind: input, shape index: {}]
  %s6 = inlined_call_operand.vmem [shape: f32[16,48], index: 6, kind: input, shape index: {}]
  %s7 = inlined_call_operand.vmem [shape: f32[16,1], index: 7, kind: input, shape index: {}]
  %s8 = inlined_call_operand.vmem [shape: f32[16,16], index: 8, kind: input, shape index: {}]
  %s9 = inlined_call_operand.vmem [shape: f32[1,16], index: 9, kind: input, shape index: {}]
  %s10 = inlined_call_operand.vmem [shape: f32[16,48], index: 10, kind: input, shape index: {}]
  %s11 = inlined_call_operand.vmem [shape: f32[1,48], index: 11, kind: input, shape index: {}]
  %s12 = inlined_call_operand.vmem [shape: f32[16,8], index: 12, kind: input, shape index: {}]
  %s13 = inlined_call_operand.vmem [shape: f32[1,8], index: 13, kind: input, shape index: {}]
  %s14 = inlined_call_operand.hbm [shape: f32[16,8], index: 14, kind: output, shape index: {}]
  %s15 = sld [smem:[#allocation0]]
  $region66: #{mamba_block.1} parent=0
    _
  %s17 = ssub.s32 1, %s15
  %s18 = scalar_select 0, %s17, %s15
  $region1: #{mamba_block.1} parent=0
    #allocation2 [shape = 'u8[8192]{0}', space=vmem, size = 0x2000, scoped, tag = 'output window, operand 0, single buffered']
    #allocation3 [shape = 's32[1]{0}', space=sflag, size = 0x4, scoped, tag = 'scoped memory for mamba_block.1']
    %19 = vsyncpa [#allocation3], 0
    // Predicated region
    $region2: #{mamba_block.1} parent=1 // pred_check
      _
    $region3: #{mamba_block.1} parent=1 // pred_check_branch
      %21 = sbr.rel (0) target = $region5
    $region4: #{mamba_block.1} parent=1 // pred_region
      _
    $region5: #{mamba_block.1} parent=1 // pred_fallthru
      _
    // Predicated region
    $region6: #{mamba_block.1} parent=1 // pred_check
      _
    $region7: #{mamba_block.1} parent=1 // pred_check_branch
      %23 = sbr.rel (0) target = $region9
    $region8: #{mamba_block.1} parent=1 // pred_region
      _
    $region9: #{mamba_block.1} parent=1 // pred_fallthru
      _
    // Predicated region
    $region10: #{mamba_block.1} parent=1 // pred_check
      _
    $region11: #{mamba_block.1} parent=1 // pred_check_branch
      %25 = sbr.rel (0) target = $region13
    $region12: #{mamba_block.1} parent=1 // pred_region
      _
    $region13: #{mamba_block.1} parent=1 // pred_fallthru
      _
    // Predicated region
    $region14: #{mamba_block.1} parent=1 // pred_check
      _
    $region15: #{mamba_block.1} parent=1 // pred_check_branch
      %27 = sbr.rel (0) target = $region17
    $region16: #{mamba_block.1} parent=1 // pred_region
      _
    $region17: #{mamba_block.1} parent=1 // pred_fallthru
      _
    // Predicated region
    $region18: #{mamba_block.1} parent=1 // pred_check
      _
    $region19: #{mamba_block.1} parent=1 // pred_check_branch
      %29 = sbr.rel (0) target = $region21
    $region20: #{mamba_block.1} parent=1 // pred_region
      _
    $region21: #{mamba_block.1} parent=1 // pred_fallthru
      _
    // Predicated region
    $region22: #{mamba_block.1} parent=1 // pred_check
      _
    $region23: #{mamba_block.1} parent=1 // pred_check_branch
      %31 = sbr.rel (0) target = $region25
    $region24: #{mamba_block.1} parent=1 // pred_region
      _
    $region25: #{mamba_block.1} parent=1 // pred_fallthru
      _
    // Predicated region
    $region26: #{mamba_block.1} parent=1 // pred_check
      _
    $region27: #{mamba_block.1} parent=1 // pred_check_branch
      %33 = sbr.rel (0) target = $region29
    $region28: #{mamba_block.1} parent=1 // pred_region
      _
    $region29: #{mamba_block.1} parent=1 // pred_fallthru
      _
    // Predicated region
    $region30: #{mamba_block.1} parent=1 // pred_check
      _
    $region31: #{mamba_block.1} parent=1 // pred_check_branch
      %35 = sbr.rel (0) target = $region33
    $region32: #{mamba_block.1} parent=1 // pred_region
      _
    $region33: #{mamba_block.1} parent=1 // pred_fallthru
      _
    // Predicated region
    $region34: #{mamba_block.1} parent=1 // pred_check
      _
    $region35: #{mamba_block.1} parent=1 // pred_check_branch
      %37 = sbr.rel (0) target = $region37
    $region36: #{mamba_block.1} parent=1 // pred_region
      _
    $region37: #{mamba_block.1} parent=1 // pred_fallthru
      _
    // Predicated region
    $region38: #{mamba_block.1} parent=1 // pred_check
      _
    $region39: #{mamba_block.1} parent=1 // pred_check_branch
      %39 = sbr.rel (0) target = $region41
    $region40: #{mamba_block.1} parent=1 // pred_region
      _
    $region41: #{mamba_block.1} parent=1 // pred_fallthru
      _
    // Predicated region
    $region42: #{mamba_block.1} parent=1 // pred_check
      _
    $region43: #{mamba_block.1} parent=1 // pred_check_branch
      %41 = sbr.rel (0) target = $region45
    $region44: #{mamba_block.1} parent=1 // pred_region
      _
    $region45: #{mamba_block.1} parent=1 // pred_fallthru
      _
    // Predicated region
    $region46: #{mamba_block.1} parent=1 // pred_check
      _
    $region47: #{mamba_block.1} parent=1 // pred_check_branch
      %43 = sbr.rel (0) target = $region49
    $region48: #{mamba_block.1} parent=1 // pred_region
      _
    $region49: #{mamba_block.1} parent=1 // pred_fallthru
      _
    // Predicated region
    $region50: #{mamba_block.1} parent=1 // pred_check
      _
    $region51: #{mamba_block.1} parent=1 // pred_check_branch
      %45 = sbr.rel (0) target = $region53
    $region52: #{mamba_block.1} parent=1 // pred_region
      _
    $region53: #{mamba_block.1} parent=1 // pred_fallthru
      _
    // Predicated region
    $region54: #{mamba_block.1} parent=1 // pred_check
      _
    $region55: #{mamba_block.1} parent=1 // pred_check_branch
      %47 = sbr.rel (0) target = $region57
    $region56: #{mamba_block.1} parent=1 // pred_region
      _
    $region57: #{mamba_block.1} parent=1 // pred_fallthru
      _
    %v48 = vld [vmem:[%s0] sm:$0xff]
    %v49 = vld [vmem:[%s0 + $0x8] sm:$0xff]
    %v50 = vmul.f32 %v48, %v48
    %v51 = vmul.f32 %v49, %v49
    %vm52 = vcmask 64512
    %v53 = vsel %vm52, %v50, 0.0
    %54 = vadd.xlane.f32.xlu0 %v53
    %v55 = vpop.xlane.xlu0 %54
    %v56 = vsel %vm52, %v51, 0.0
    %57 = vadd.xlane.f32.xlu0 %v56
    %v58 = vpop.xlane.xlu0 %57
    %v59 = vrcp.pop 8.0
    %v60 = vmul.f32 %v55, %v59
    %v61 = vmul.f32 %v58, %v59
    %v62 = vadd.f32 %v60, 1e-05
    %v63 = vadd.f32 %v61, 1e-05
    %v64 = vrsqrt.pop %v62
    %v65 = vrsqrt.pop %v63
    %v66 = vmul.f32 %v48, %v64
    %v67 = vmul.f32 %v49, %v65
    %v68 = vld [vmem:[%s1] sm:$0x1]
    %v70 = vlaneseq
    %v71 = vshrl.u32 %v70, 7
    %v72 = vsub.s32 0, %v71
    %v73 = vrot.slane %v68, %v72
    %v75 = vmul.f32 %v66, %v73
    %v76 = vmul.f32 %v67, %v73
    %v77 = vld [vmem:[%s2] sm:$0xff]
    %v78 = vld [vmem:[%s3] sm:$0x1]
    %v80 = vlaneseq
    %v81 = vshrl.u32 %v80, 7
    %v82 = vsub.s32 0, %v81
    %v83 = vrot.slane %v78, %v82
    %v86 = vsel %vm52, %v75, 0
    %v89 = vsel %vm52, %v76, 0
    %91 = vmatprep.subr.mxu0 0.0
    %92 = vmatpush1.msra.mxu0 %v77
    %93 = vmatprep.subr.mxu0 0.0
    %94 = vmatpush1.msra.mxu0 0.0
    %95 = vmatprep.subr.mxu0 0.0
    %96 = vmatpush1.msra.mxu0 0.0
    %97 = vmatprep.subr.mxu0 0.0
    %98 = vmatpush1.msra.mxu0 0.0
    %99 = vmatprep.subr.mxu0 0.0
    %100 = vmatpush1.msra.mxu0 0.0
    %101 = vmatprep.subr.mxu0 0.0
    %102 = vmatpush1.msra.mxu0 0.0
    %103 = vmatprep.subr.mxu0 0.0
    %104 = vmatpush1.msra.mxu0 0.0
    %105 = vmatprep.subr.mxu0 0.0
    %106 = vmatpush1.msra.mxu0 0.0
    %107 = vmatprep.subr.mxu0 0.0
    %108 = vmatpush1.msra.mxu0 0.0
    %109 = vmatprep.subr.mxu0 0.0
    %110 = vmatpush1.msra.mxu0 0.0
    %111 = vmatprep.subr.mxu0 0.0
    %112 = vmatpush1.msra.mxu0 0.0
    %113 = vmatprep.subr.mxu0 0.0
    %114 = vmatpush1.msra.mxu0 0.0
    %115 = vmatprep.subr.mxu0 0.0
    %116 = vmatpush1.msra.mxu0 0.0
    %117 = vmatprep.subr.mxu0 0.0
    %118 = vmatpush1.msra.mxu0 0.0
    %119 = vmatprep.subr.mxu0 0.0
    %120 = vmatpush1.msra.mxu0 0.0
    %121 = vmatprep.subr.mxu0 0.0
    %122 = vmatpush1.msra.mxu0 0.0
    %123 = vmatprep.subr.mxu0 0.0
    %124 = vmatpush1.msra.mxu0 0.0
    %125 = vmatprep.subr.mxu0 0.0
    %126 = vmatpush1.msra.mxu0 0.0
    %127 = vmatprep.subr.mxu0 0.0
    %128 = vmatpush1.msra.mxu0 0.0
    %129 = vmatprep.subr.mxu0 0.0
    %130 = vmatpush1.msra.mxu0 0.0
    %131 = vmatprep.subr.mxu0 0.0
    %132 = vmatpush1.msra.mxu0 0.0
    %133 = vmatprep.subr.mxu0 0.0
    %134 = vmatpush1.msra.mxu0 0.0
    %135 = vmatprep.subr.mxu0 0.0
    %136 = vmatpush1.msra.mxu0 0.0
    %137 = vmatprep.subr.mxu0 0.0
    %138 = vmatpush1.msra.mxu0 0.0
    %139 = vmatprep.subr.mxu0 0.0
    %140 = vmatpush1.msra.mxu0 0.0
    %141 = vmatprep.subr.mxu0 0.0
    %142 = vmatpush1.msra.mxu0 0.0
    %143 = vmatprep.subr.mxu0 0.0
    %144 = vmatpush1.msra.mxu0 0.0
    %145 = vmatprep.subr.mxu0 0.0
    %146 = vmatpush1.msra.mxu0 0.0
    %147 = vmatprep.subr.mxu0 0.0
    %148 = vmatpush1.msra.mxu0 0.0
    %149 = vmatprep.subr.mxu0 0.0
    %150 = vmatpush1.msra.mxu0 0.0
    %151 = vmatprep.subr.mxu0 0.0
    %152 = vmatpush1.msra.mxu0 0.0
    %153 = vmatprep.subr.mxu0 0.0
    %154 = vmatpush1.msra.mxu0 0.0
    %155 = vmatprep.mubr.f32.mxu0 0.0
    %156 = vmatmul.mubr.f32.gmra.mrb[0].mxu0 %v86
    %v157 = vpop.f32.mrb[0].mxu0
    %v158 = vadd.f32 %v83, %v157
    %v159 = vpop.f32.mrb[0].mxu0
    %160 = vmatprep.mubr.f32.mxu0 0.0
    %161 = vmatmul.mubr.f32.gmra.mrb[0].mxu0 %v89
    %v162 = vpop.f32.mrb[0].mxu0
    %v163 = vadd.f32 %v83, %v162
    %v164 = vpop.f32.mrb[0].mxu0
    %165 = vdwg.mxu0
    %v166 = vxor.u32 %v158, 2147483648
    %v167 = vxor.u32 %v163, 2147483648
    %v168 = vmul.f32 %v166, 1.442695
    %v169 = vpow.pop %v168
    %v170 = vmul.f32 %v167, 1.442695
    %v171 = vpow.pop %v170
    %v172 = vadd.f32 %v169, 1.0
    %v173 = vadd.f32 %v171, 1.0
    %v174 = vrcp.pop %v172
    %v175 = vmul.f32 1.0, %v174
    %v176 = vrcp.pop %v173
    %v177 = vmul.f32 1.0, %v176
    %v178 = vmul.f32 %v158, %v175
    %v179 = vmul.f32 %v163, %v177
    %v180 = vld [vmem:[%s4] sm:$0xff]
    %v181 = vld [vmem:[%s4 + $0x8] sm:$0xff]
    %vm182 = vcmask 130048
    %v184 = vsel %vm182, %v158, 0
    %v187 = vsel %vm182, %v163, 0
    %189 = vmatprep.subr.mxu0 0.0
    %190 = vmatpush1.msra.mxu0 %v180
    %191 = vmatprep.subr.mxu0 0.0
    %192 = vmatpush1.msra.mxu0 %v181
    %193 = vmatprep.subr.mxu0 0.0
    %194 = vmatpush1.msra.mxu0 0.0
    %195 = vmatprep.subr.mxu0 0.0
    %196 = vmatpush1.msra.mxu0 0.0
    %197 = vmatprep.subr.mxu0 0.0
    %198 = vmatpush1.msra.mxu0 0.0
    %199 = vmatprep.subr.mxu0 0.0
    %200 = vmatpush1.msra.mxu0 0.0
    %201 = vmatprep.subr.mxu0 0.0
    %202 = vmatpush1.msra.mxu0 0.0
    %203 = vmatprep.subr.mxu0 0.0
    %204 = vmatpush1.msra.mxu0 0.0
    %205 = vmatprep.subr.mxu0 0.0
    %206 = vmatpush1.msra.mxu0 0.0
    %207 = vmatprep.subr.mxu0 0.0
    %208 = vmatpush1.msra.mxu0 0.0
    %209 = vmatprep.subr.mxu0 0.0
    %210 = vmatpush1.msra.mxu0 0.0
    %211 = vmatprep.subr.mxu0 0.0
    %212 = vmatpush1.msra.mxu0 0.0
    %213 = vmatprep.subr.mxu0 0.0
    %214 = vmatpush1.msra.mxu0 0.0
    %215 = vmatprep.subr.mxu0 0.0
    %216 = vmatpush1.msra.mxu0 0.0
    %217 = vmatprep.subr.mxu0 0.0
    %218 = vmatpush1.msra.mxu0 0.0
    %219 = vmatprep.subr.mxu0 0.0
    %220 = vmatpush1.msra.mxu0 0.0
    %221 = vmatprep.subr.mxu0 0.0
    %222 = vmatpush1.msra.mxu0 0.0
    %223 = vmatprep.subr.mxu0 0.0
    %224 = vmatpush1.msra.mxu0 0.0
    %225 = vmatprep.subr.mxu0 0.0
    %226 = vmatpush1.msra.mxu0 0.0
    %227 = vmatprep.subr.mxu0 0.0
    %228 = vmatpush1.msra.mxu0 0.0
    %229 = vmatprep.subr.mxu0 0.0
    %230 = vmatpush1.msra.mxu0 0.0
    %231 = vmatprep.subr.mxu0 0.0
    %232 = vmatpush1.msra.mxu0 0.0
    %233 = vmatprep.subr.mxu0 0.0
    %234 = vmatpush1.msra.mxu0 0.0
    %235 = vmatprep.subr.mxu0 0.0
    %236 = vmatpush1.msra.mxu0 0.0
    %237 = vmatprep.subr.mxu0 0.0
    %238 = vmatpush1.msra.mxu0 0.0
    %239 = vmatprep.subr.mxu0 0.0
    %240 = vmatpush1.msra.mxu0 0.0
    %241 = vmatprep.subr.mxu0 0.0
    %242 = vmatpush1.msra.mxu0 0.0
    %243 = vmatprep.subr.mxu0 0.0
    %244 = vmatpush1.msra.mxu0 0.0
    %245 = vmatprep.subr.mxu0 0.0
    %246 = vmatpush1.msra.mxu0 0.0
    %247 = vmatprep.subr.mxu0 0.0
    %248 = vmatpush1.msra.mxu0 0.0
    %249 = vmatprep.subr.mxu0 0.0
    %250 = vmatpush1.msra.mxu0 0.0
    %251 = vmatprep.subr.mxu0 0.0
    %252 = vmatpush1.msra.mxu0 0.0
    %253 = vmatprep.mubr.f32.mxu0 0.0
    %254 = vmatmul.mubr.f32.gmra.mrb[0].mxu0 %v184
    %v255 = vpop.f32.mrb[0].mxu0
    %v256 = vadd.f32 0.0, %v255
    %v257 = vpop.f32.mrb[0].mxu0
    %258 = vmatprep.mubr.f32.mxu0 0.0
    %259 = vmatmul.mubr.f32.gmra.mrb[0].mxu0 %v187
    %v260 = vpop.f32.mrb[0].mxu0
    %v261 = vadd.f32 0.0, %v260
    %v262 = vpop.f32.mrb[0].mxu0
    %263 = vdwg.mxu0
    %v264 = vld [vmem:[%s5] sm:$0xff]
    %v265 = vld [vmem:[%s5 + $0x8] sm:$0xff]
    %266 = vmatprep.subr.mxu0 0.0
    %267 = vmatpush1.msra.mxu0 %v264
    %268 = vmatprep.subr.mxu0 0.0
    %269 = vmatpush1.msra.mxu0 %v265
    %270 = vmatprep.subr.mxu0 0.0
    %271 = vmatpush1.msra.mxu0 0.0
    %272 = vmatprep.subr.mxu0 0.0
    %273 = vmatpush1.msra.mxu0 0.0
    %274 = vmatprep.subr.mxu0 0.0
    %275 = vmatpush1.msra.mxu0 0.0
    %276 = vmatprep.subr.mxu0 0.0
    %277 = vmatpush1.msra.mxu0 0.0
    %278 = vmatprep.subr.mxu0 0.0
    %279 = vmatpush1.msra.mxu0 0.0
    %280 = vmatprep.subr.mxu0 0.0
    %281 = vmatpush1.msra.mxu0 0.0
    %282 = vmatprep.subr.mxu0 0.0
    %283 = vmatpush1.msra.mxu0 0.0
    %284 = vmatprep.subr.mxu0 0.0
    %285 = vmatpush1.msra.mxu0 0.0
    %286 = vmatprep.subr.mxu0 0.0
    %287 = vmatpush1.msra.mxu0 0.0
    %288 = vmatprep.subr.mxu0 0.0
    %289 = vmatpush1.msra.mxu0 0.0
    %290 = vmatprep.subr.mxu0 0.0
    %291 = vmatpush1.msra.mxu0 0.0
    %292 = vmatprep.subr.mxu0 0.0
    %293 = vmatpush1.msra.mxu0 0.0
    %294 = vmatprep.subr.mxu0 0.0
    %295 = vmatpush1.msra.mxu0 0.0
    %296 = vmatprep.subr.mxu0 0.0
    %297 = vmatpush1.msra.mxu0 0.0
    %298 = vmatprep.subr.mxu0 0.0
    %299 = vmatpush1.msra.mxu0 0.0
    %300 = vmatprep.subr.mxu0 0.0
    %301 = vmatpush1.msra.mxu0 0.0
    %302 = vmatprep.subr.mxu0 0.0
    %303 = vmatpush1.msra.mxu0 0.0
    %304 = vmatprep.subr.mxu0 0.0
    %305 = vmatpush1.msra.mxu0 0.0
    %306 = vmatprep.subr.mxu0 0.0
    %307 = vmatpush1.msra.mxu0 0.0
    %308 = vmatprep.subr.mxu0 0.0
    %309 = vmatpush1.msra.mxu0 0.0
    %310 = vmatprep.subr.mxu0 0.0
    %311 = vmatpush1.msra.mxu0 0.0
    %312 = vmatprep.subr.mxu0 0.0
    %313 = vmatpush1.msra.mxu0 0.0
    %314 = vmatprep.subr.mxu0 0.0
    %315 = vmatpush1.msra.mxu0 0.0
    %316 = vmatprep.subr.mxu0 0.0
    %317 = vmatpush1.msra.mxu0 0.0
    %318 = vmatprep.subr.mxu0 0.0
    %319 = vmatpush1.msra.mxu0 0.0
    %320 = vmatprep.subr.mxu0 0.0
    %321 = vmatpush1.msra.mxu0 0.0
    %322 = vmatprep.subr.mxu0 0.0
    %323 = vmatpush1.msra.mxu0 0.0
    %324 = vmatprep.subr.mxu0 0.0
    %325 = vmatpush1.msra.mxu0 0.0
    %326 = vmatprep.subr.mxu0 0.0
    %327 = vmatpush1.msra.mxu0 0.0
    %328 = vmatprep.subr.mxu0 0.0
    %329 = vmatpush1.msra.mxu0 0.0
    %330 = vmatprep.mubr.f32.mxu0 0.0
    %331 = vmatmul.mubr.f32.gmra.mrb[0].mxu0 %v184
    %v332 = vpop.f32.mrb[0].mxu0
    %v333 = vadd.f32 0.0, %v332
    %v334 = vpop.f32.mrb[0].mxu0
    %335 = vmatprep.mubr.f32.mxu0 0.0
    %336 = vmatmul.mubr.f32.gmra.mrb[0].mxu0 %v187
    %v337 = vpop.f32.mrb[0].mxu0
    %v338 = vadd.f32 0.0, %v337
    %v339 = vpop.f32.mrb[0].mxu0
    %340 = vdwg.mxu0
    %v341 = vld [vmem:[%s6] sm:$0xff]
    %v342 = vld [vmem:[%s6 + $0x8] sm:$0xff]
    %v343 = vld [vmem:[%s7] sm:$0xff]
    %v344 = vld [vmem:[%s7 + $0x8] sm:$0xff]
    %346 = vset.pattern.permute.xlu0 0
    %347 = vperm.xlu0 %346, %v343
    %v348 = vpop.permute.xlu0 %347
    %351 = vset.pattern.permute.xlu0 0
    %352 = vperm.xlu0 %351, %v344
    %v353 = vpop.permute.xlu0 %352
    %vm355 = vcmask 392192
    %v357 = vsel %vm355, %v341, 0
    %v360 = vsel %vm355, %v342, 0
    %362 = vmatprep.subr.mxu0 0.0
    %363 = vmatpush1.msra.mxu0 %v256
    %364 = vmatprep.subr.mxu0 0.0
    %365 = vmatpush1.msra.mxu0 %v261
    %366 = vmatprep.subr.mxu0 0.0
    %367 = vmatpush1.msra.mxu0 %v158
    %368 = vmatprep.subr.mxu0 0.0
    %369 = vmatpush1.msra.mxu0 %v163
    %370 = vmatprep.subr.mxu0 0.0
    %371 = vmatpush1.msra.mxu0 %v333
    %372 = vmatprep.subr.mxu0 0.0
    %373 = vmatpush1.msra.mxu0 %v338
    %374 = vmatprep.subr.mxu0 0.0
    %375 = vmatpush1.msra.mxu0 0.0
    %376 = vmatprep.subr.mxu0 0.0
    %377 = vmatpush1.msra.mxu0 0.0
    %378 = vmatprep.subr.mxu0 0.0
    %379 = vmatpush1.msra.mxu0 0.0
    %380 = vmatprep.subr.mxu0 0.0
    %381 = vmatpush1.msra.mxu0 0.0
    %382 = vmatprep.subr.mxu0 0.0
    %383 = vmatpush1.msra.mxu0 0.0
    %384 = vmatprep.subr.mxu0 0.0
    %385 = vmatpush1.msra.mxu0 0.0
    %386 = vmatprep.subr.mxu0 0.0
    %387 = vmatpush1.msra.mxu0 0.0
    %388 = vmatprep.subr.mxu0 0.0
    %389 = vmatpush1.msra.mxu0 0.0
    %390 = vmatprep.subr.mxu0 0.0
    %391 = vmatpush1.msra.mxu0 0.0
    %392 = vmatprep.subr.mxu0 0.0
    %393 = vmatpush1.msra.mxu0 0.0
    %394 = vmatprep.subr.mxu0 0.0
    %395 = vmatpush1.msra.mxu0 0.0
    %396 = vmatprep.subr.mxu0 0.0
    %397 = vmatpush1.msra.mxu0 0.0
    %398 = vmatprep.subr.mxu0 0.0
    %399 = vmatpush1.msra.mxu0 0.0
    %400 = vmatprep.subr.mxu0 0.0
    %401 = vmatpush1.msra.mxu0 0.0
    %402 = vmatprep.subr.mxu0 0.0
    %403 = vmatpush1.msra.mxu0 0.0
    %404 = vmatprep.subr.mxu0 0.0
    %405 = vmatpush1.msra.mxu0 0.0
    %406 = vmatprep.subr.mxu0 0.0
    %407 = vmatpush1.msra.mxu0 0.0
    %408 = vmatprep.subr.mxu0 0.0
    %409 = vmatpush1.msra.mxu0 0.0
    %410 = vmatprep.subr.mxu0 0.0
    %411 = vmatpush1.msra.mxu0 0.0
    %412 = vmatprep.subr.mxu0 0.0
    %413 = vmatpush1.msra.mxu0 0.0
    %414 = vmatprep.subr.mxu0 0.0
    %415 = vmatpush1.msra.mxu0 0.0
    %416 = vmatprep.subr.mxu0 0.0
    %417 = vmatpush1.msra.mxu0 0.0
    %418 = vmatprep.subr.mxu0 0.0
    %419 = vmatpush1.msra.mxu0 0.0
    %420 = vmatprep.subr.mxu0 0.0
    %421 = vmatpush1.msra.mxu0 0.0
    %422 = vmatprep.subr.mxu0 0.0
    %423 = vmatpush1.msra.mxu0 0.0
    %424 = vmatprep.subr.mxu0 0.0
    %425 = vmatpush1.msra.mxu0 0.0
    %426 = vmatprep.mubr.f32.mxu0 0.0
    %427 = vmatmul.mubr.f32.gmra.mrb[0].mxu0 %v357
    %v428 = vpop.f32.mrb[0].mxu0
    %v429 = vadd.f32 %v348, %v428
    %v430 = vpop.f32.mrb[0].mxu0
    %431 = vmatprep.mubr.f32.mxu0 0.0
    %432 = vmatmul.mubr.f32.gmra.mrb[0].mxu0 %v360
    %v433 = vpop.f32.mrb[0].mxu0
    %v434 = vadd.f32 %v353, %v433
    %v435 = vpop.f32.mrb[0].mxu0
    %436 = vdwg.mxu0
    %v437 = vxor.u32 %v429, 2147483648
    %v438 = vxor.u32 %v434, 2147483648
    %v439 = vmul.f32 %v437, 1.442695
    %v440 = vpow.pop %v439
    %v441 = vmul.f32 %v438, 1.442695
    %v442 = vpow.pop %v441
    %v443 = vadd.f32 %v440, 1.0
    %v444 = vadd.f32 %v442, 1.0
    %v445 = vrcp.pop %v443
    %v446 = vmul.f32 1.0, %v445
    %v447 = vrcp.pop %v444
    %v448 = vmul.f32 1.0, %v447
    %v449 = vmul.f32 %v429, %v446
    %v450 = vmul.f32 %v434, %v448
    %v451 = vld [vmem:[%s8] sm:$0xff]
    %v452 = vld [vmem:[%s8 + $0x8] sm:$0xff]
    %v453 = vld [vmem:[%s9] sm:$0x1]
    %v455 = vlaneseq
    %v456 = vshrl.u32 %v455, 7
    %v457 = vsub.s32 0, %v456
    %v458 = vrot.slane %v453, %v457
    %v461 = vsel %vm182, %v449, 0
    %v464 = vsel %vm182, %v450, 0
    %466 = vmatprep.subr.mxu0 0.0
    %467 = vmatpush1.msra.mxu0 %v451
    %468 = vmatprep.subr.mxu0 0.0
    %469 = vmatpush1.msra.mxu0 %v452
    %470 = vmatprep.subr.mxu0 0.0
    %471 = vmatpush1.msra.mxu0 0.0
    %472 = vmatprep.subr.mxu0 0.0
    %473 = vmatpush1.msra.mxu0 0.0
    %474 = vmatprep.subr.mxu0 0.0
    %475 = vmatpush1.msra.mxu0 0.0
    %476 = vmatprep.subr.mxu0 0.0
    %477 = vmatpush1.msra.mxu0 0.0
    %478 = vmatprep.subr.mxu0 0.0
    %479 = vmatpush1.msra.mxu0 0.0
    %480 = vmatprep.subr.mxu0 0.0
    %481 = vmatpush1.msra.mxu0 0.0
    %482 = vmatprep.subr.mxu0 0.0
    %483 = vmatpush1.msra.mxu0 0.0
    %484 = vmatprep.subr.mxu0 0.0
    %485 = vmatpush1.msra.mxu0 0.0
    %486 = vmatprep.subr.mxu0 0.0
    %487 = vmatpush1.msra.mxu0 0.0
    %488 = vmatprep.subr.mxu0 0.0
    %489 = vmatpush1.msra.mxu0 0.0
    %490 = vmatprep.subr.mxu0 0.0
    %491 = vmatpush1.msra.mxu0 0.0
    %492 = vmatprep.subr.mxu0 0.0
    %493 = vmatpush1.msra.mxu0 0.0
    %494 = vmatprep.subr.mxu0 0.0
    %495 = vmatpush1.msra.mxu0 0.0
    %496 = vmatprep.subr.mxu0 0.0
    %497 = vmatpush1.msra.mxu0 0.0
    %498 = vmatprep.subr.mxu0 0.0
    %499 = vmatpush1.msra.mxu0 0.0
    %500 = vmatprep.subr.mxu0 0.0
    %501 = vmatpush1.msra.mxu0 0.0
    %502 = vmatprep.subr.mxu0 0.0
    %503 = vmatpush1.msra.mxu0 0.0
    %504 = vmatprep.subr.mxu0 0.0
    %505 = vmatpush1.msra.mxu0 0.0
    %506 = vmatprep.subr.mxu0 0.0
    %507 = vmatpush1.msra.mxu0 0.0
    %508 = vmatprep.subr.mxu0 0.0
    %509 = vmatpush1.msra.mxu0 0.0
    %510 = vmatprep.subr.mxu0 0.0
    %511 = vmatpush1.msra.mxu0 0.0
    %512 = vmatprep.subr.mxu0 0.0
    %513 = vmatpush1.msra.mxu0 0.0
    %514 = vmatprep.subr.mxu0 0.0
    %515 = vmatpush1.msra.mxu0 0.0
    %516 = vmatprep.subr.mxu0 0.0
    %517 = vmatpush1.msra.mxu0 0.0
    %518 = vmatprep.subr.mxu0 0.0
    %519 = vmatpush1.msra.mxu0 0.0
    %520 = vmatprep.subr.mxu0 0.0
    %521 = vmatpush1.msra.mxu0 0.0
    %522 = vmatprep.subr.mxu0 0.0
    %523 = vmatpush1.msra.mxu0 0.0
    %524 = vmatprep.subr.mxu0 0.0
    %525 = vmatpush1.msra.mxu0 0.0
    %526 = vmatprep.subr.mxu0 0.0
    %527 = vmatpush1.msra.mxu0 0.0
    %528 = vmatprep.subr.mxu0 0.0
    %529 = vmatpush1.msra.mxu0 0.0
    %530 = vmatprep.mubr.f32.mxu0 0.0
    %531 = vmatmul.mubr.f32.gmra.mrb[0].mxu0 %v461
    %v532 = vpop.f32.mrb[0].mxu0
    %v533 = vadd.f32 %v458, %v532
    %v534 = vpop.f32.mrb[0].mxu0
    %535 = vmatprep.mubr.f32.mxu0 0.0
    %536 = vmatmul.mubr.f32.gmra.mrb[0].mxu0 %v464
    %v537 = vpop.f32.mrb[0].mxu0
    %v538 = vadd.f32 %v458, %v537
    %v539 = vpop.f32.mrb[0].mxu0
    %540 = vdwg.mxu0
    %v541 = vld [vmem:[%s10] sm:$0xff]
    %v542 = vld [vmem:[%s10 + $0x8] sm:$0xff]
    %v543 = vld [vmem:[%s11] sm:$0x1]
    %v545 = vlaneseq
    %v546 = vshrl.u32 %v545, 7
    %v547 = vsub.s32 0, %v546
    %v548 = vrot.slane %v543, %v547
    %v551 = vsel %vm182, %v533, 0
    %v554 = vsel %vm182, %v538, 0
    %556 = vmatprep.subr.mxu0 0.0
    %557 = vmatpush1.msra.mxu0 %v541
    %558 = vmatprep.subr.mxu0 0.0
    %559 = vmatpush1.msra.mxu0 %v542
    %560 = vmatprep.subr.mxu0 0.0
    %561 = vmatpush1.msra.mxu0 0.0
    %562 = vmatprep.subr.mxu0 0.0
    %563 = vmatpush1.msra.mxu0 0.0
    %564 = vmatprep.subr.mxu0 0.0
    %565 = vmatpush1.msra.mxu0 0.0
    %566 = vmatprep.subr.mxu0 0.0
    %567 = vmatpush1.msra.mxu0 0.0
    %568 = vmatprep.subr.mxu0 0.0
    %569 = vmatpush1.msra.mxu0 0.0
    %570 = vmatprep.subr.mxu0 0.0
    %571 = vmatpush1.msra.mxu0 0.0
    %572 = vmatprep.subr.mxu0 0.0
    %573 = vmatpush1.msra.mxu0 0.0
    %574 = vmatprep.subr.mxu0 0.0
    %575 = vmatpush1.msra.mxu0 0.0
    %576 = vmatprep.subr.mxu0 0.0
    %577 = vmatpush1.msra.mxu0 0.0
    %578 = vmatprep.subr.mxu0 0.0
    %579 = vmatpush1.msra.mxu0 0.0
    %580 = vmatprep.subr.mxu0 0.0
    %581 = vmatpush1.msra.mxu0 0.0
    %582 = vmatprep.subr.mxu0 0.0
    %583 = vmatpush1.msra.mxu0 0.0
    %584 = vmatprep.subr.mxu0 0.0
    %585 = vmatpush1.msra.mxu0 0.0
    %586 = vmatprep.subr.mxu0 0.0
    %587 = vmatpush1.msra.mxu0 0.0
    %588 = vmatprep.subr.mxu0 0.0
    %589 = vmatpush1.msra.mxu0 0.0
    %590 = vmatprep.subr.mxu0 0.0
    %591 = vmatpush1.msra.mxu0 0.0
    %592 = vmatprep.subr.mxu0 0.0
    %593 = vmatpush1.msra.mxu0 0.0
    %594 = vmatprep.subr.mxu0 0.0
    %595 = vmatpush1.msra.mxu0 0.0
    %596 = vmatprep.subr.mxu0 0.0
    %597 = vmatpush1.msra.mxu0 0.0
    %598 = vmatprep.subr.mxu0 0.0
    %599 = vmatpush1.msra.mxu0 0.0
    %600 = vmatprep.subr.mxu0 0.0
    %601 = vmatpush1.msra.mxu0 0.0
    %602 = vmatprep.subr.mxu0 0.0
    %603 = vmatpush1.msra.mxu0 0.0
    %604 = vmatprep.subr.mxu0 0.0
    %605 = vmatpush1.msra.mxu0 0.0
    %606 = vmatprep.subr.mxu0 0.0
    %607 = vmatpush1.msra.mxu0 0.0
    %608 = vmatprep.subr.mxu0 0.0
    %609 = vmatpush1.msra.mxu0 0.0
    %610 = vmatprep.subr.mxu0 0.0
    %611 = vmatpush1.msra.mxu0 0.0
    %612 = vmatprep.subr.mxu0 0.0
    %613 = vmatpush1.msra.mxu0 0.0
    %614 = vmatprep.subr.mxu0 0.0
    %615 = vmatpush1.msra.mxu0 0.0
    %616 = vmatprep.subr.mxu0 0.0
    %617 = vmatpush1.msra.mxu0 0.0
    %618 = vmatprep.subr.mxu0 0.0
    %619 = vmatpush1.msra.mxu0 0.0
    %620 = vmatprep.mubr.f32.mxu0 0.0
    %621 = vmatmul.mubr.f32.gmra.mrb[0].mxu0 %v551
    %v622 = vpop.f32.mrb[0].mxu0
    %v623 = vadd.f32 %v548, %v622
    %v624 = vpop.f32.mrb[0].mxu0
    %625 = vmatprep.mubr.f32.mxu0 0.0
    %626 = vmatmul.mubr.f32.gmra.mrb[0].mxu0 %v554
    %v627 = vpop.f32.mrb[0].mxu0
    %v628 = vadd.f32 %v548, %v627
    %v629 = vpop.f32.mrb[0].mxu0
    %630 = vdwg.mxu0
    %v631 = vmax.f32 %v623, 0.0
    %v632 = vmax.f32 %v628, 0.0
    %vm633 = vcmp.ne.f32.partialorder %v623, %v623
    %vm634 = vcmp.ne.f32.partialorder %v628, %v628
    %v635 = vadd.f32 %v623, 0.0
    %v636 = vadd.f32 %v628, 0.0
    %v637 = vand.u32 2147483647, %v623
    %v638 = vand.u32 2147483647, %v628
    %v639 = vsub.f32 0.0, %v637
    %v640 = vsub.f32 0.0, %v638
    %v641 = vmul.f32 %v639, 1.442695
    %v642 = vpow.pop %v641
    %v643 = vmul.f32 %v640, 1.442695
    %v644 = vpow.pop %v643
    %v645 = vadd.f32 %v642, 1.0
    %v646 = vlog2.pop %v645
    %v647 = vmul.f32 %v646, 0.6931472
    %v648 = vmul.f32 -0.5, %v642
    %v649 = vadd.f32 %v648, 1.0
    %v650 = vmul.f32 %v649, %v642
    %v651 = vand.u32 2147483647, %v642
    %vm652 = vcmp.lt.f32.partialorder %v651, 0.0004427343
    %v653 = vsel %vm652, %v650, %v647
    %v654 = vadd.f32 %v644, 1.0
    %v655 = vlog2.pop %v654
    %v656 = vmul.f32 %v655, 0.6931472
    %v657 = vmul.f32 -0.5, %v644
    %v658 = vadd.f32 %v657, 1.0
    %v659 = vmul.f32 %v658, %v644
    %v660 = vand.u32 2147483647, %v644
    %vm661 = vcmp.lt.f32.partialorder %v660, 0.0004427343
    %v662 = vsel %vm661, %v659, %v656
    %v663 = vadd.f32 %v631, %v653
    %v664 = vadd.f32 %v632, %v662
    %v665 = vsel %vm633, %v635, %v663
    %v666 = vsel %vm634, %v636, %v664
    %669 = vrot.lane.b32.xlu0 %v623, 16
    %v670 = vpop.permute.xlu0 %669
    %671 = vrot.lane.b32.xlu0 %v628, 16
    %v672 = vpop.permute.xlu0 %671
    %v675 = vmul.f32 %v623, %v670
    %v676 = vmul.f32 %v628, %v672
    %679 = vrot.lane.b32.xlu0 %v675, 96
    %v680 = vpop.permute.xlu0 %679
    %681 = vrot.lane.b32.xlu0 %v676, 96
    %v682 = vpop.permute.xlu0 %681
    %v685 = vsel %vm182, %v680, 0.0
    %686 = vadd.xlane.f32.xlu0 %v685
    %v687 = vpop.xlane.xlu0 %686
    %v688 = vsel %vm182, %v682, 0.0
    %689 = vadd.xlane.f32.xlu0 %v688
    %v690 = vpop.xlane.xlu0 %689
    %v691 = vmul.f32 %v533, %v665
    %v692 = vmul.f32 %v538, %v666
    %v693 = vmul.f32 %v691, %v687
    %v694 = vmul.f32 %v692, %v690
    %v695 = vxor.u32 %v693, 2147483648
    %v696 = vxor.u32 %v694, 2147483648
    %v697 = vmul.f32 %v695, 1.442695
    %v698 = vpow.pop %v697
    %v699 = vmul.f32 %v696, 1.442695
    %v700 = vpow.pop %v699
    %v701 = vadd.f32 %v698, 1.0
    %v702 = vadd.f32 %v700, 1.0
    %v703 = vrcp.pop %v701
    %v704 = vmul.f32 1.0, %v703
    %v705 = vrcp.pop %v702
    %v706 = vmul.f32 1.0, %v705
    %v707 = vmul.f32 %v693, %v704
    %v708 = vmul.f32 %v694, %v706
    %711 = vrot.lane.b32.xlu0 %v178, 112
    %v712 = vpop.permute.xlu0 %711
    %713 = vrot.lane.b32.xlu0 %v179, 112
    %v714 = vpop.permute.xlu0 %713
    %v717 = vmul.f32 %v707, %v712
    %v718 = vmul.f32 %v708, %v714
    %v719 = vld [vmem:[%s12] sm:$0xff]
    %v720 = vld [vmem:[%s12 + $0x8] sm:$0xff]
    %v721 = vld [vmem:[%s13] sm:$0x1]
    %v723 = vlaneseq
    %v724 = vshrl.u32 %v723, 7
    %v725 = vsub.s32 0, %v724
    %v726 = vrot.slane %v721, %v725
    %v729 = vsel %vm182, %v717, 0
    %v732 = vsel %vm182, %v718, 0
    %734 = vmatprep.subr.mxu0 0.0
    %735 = vmatpush1.msra.mxu0 %v719
    %736 = vmatprep.subr.mxu0 0.0
    %737 = vmatpush1.msra.mxu0 %v720
    %738 = vmatprep.subr.mxu0 0.0
    %739 = vmatpush1.msra.mxu0 0.0
    %740 = vmatprep.subr.mxu0 0.0
    %741 = vmatpush1.msra.mxu0 0.0
    %742 = vmatprep.subr.mxu0 0.0
    %743 = vmatpush1.msra.mxu0 0.0
    %744 = vmatprep.subr.mxu0 0.0
    %745 = vmatpush1.msra.mxu0 0.0
    %746 = vmatprep.subr.mxu0 0.0
    %747 = vmatpush1.msra.mxu0 0.0
    %748 = vmatprep.subr.mxu0 0.0
    %749 = vmatpush1.msra.mxu0 0.0
    %750 = vmatprep.subr.mxu0 0.0
    %751 = vmatpush1.msra.mxu0 0.0
    %752 = vmatprep.subr.mxu0 0.0
    %753 = vmatpush1.msra.mxu0 0.0
    %754 = vmatprep.subr.mxu0 0.0
    %755 = vmatpush1.msra.mxu0 0.0
    %756 = vmatprep.subr.mxu0 0.0
    %757 = vmatpush1.msra.mxu0 0.0
    %758 = vmatprep.subr.mxu0 0.0
    %759 = vmatpush1.msra.mxu0 0.0
    %760 = vmatprep.subr.mxu0 0.0
    %761 = vmatpush1.msra.mxu0 0.0
    %762 = vmatprep.subr.mxu0 0.0
    %763 = vmatpush1.msra.mxu0 0.0
    %764 = vmatprep.subr.mxu0 0.0
    %765 = vmatpush1.msra.mxu0 0.0
    %766 = vmatprep.subr.mxu0 0.0
    %767 = vmatpush1.msra.mxu0 0.0
    %768 = vmatprep.subr.mxu0 0.0
    %769 = vmatpush1.msra.mxu0 0.0
    %770 = vmatprep.subr.mxu0 0.0
    %771 = vmatpush1.msra.mxu0 0.0
    %772 = vmatprep.subr.mxu0 0.0
    %773 = vmatpush1.msra.mxu0 0.0
    %774 = vmatprep.subr.mxu0 0.0
    %775 = vmatpush1.msra.mxu0 0.0
    %776 = vmatprep.subr.mxu0 0.0
    %777 = vmatpush1.msra.mxu0 0.0
    %778 = vmatprep.subr.mxu0 0.0
    %779 = vmatpush1.msra.mxu0 0.0
    %780 = vmatprep.subr.mxu0 0.0
    %781 = vmatpush1.msra.mxu0 0.0
    %782 = vmatprep.subr.mxu0 0.0
    %783 = vmatpush1.msra.mxu0 0.0
    %784 = vmatprep.subr.mxu0 0.0
    %785 = vmatpush1.msra.mxu0 0.0
    %786 = vmatprep.subr.mxu0 0.0
    %787 = vmatpush1.msra.mxu0 0.0
    %788 = vmatprep.subr.mxu0 0.0
    %789 = vmatpush1.msra.mxu0 0.0
    %790 = vmatprep.subr.mxu0 0.0
    %791 = vmatpush1.msra.mxu0 0.0
    %792 = vmatprep.subr.mxu0 0.0
    %793 = vmatpush1.msra.mxu0 0.0
    %794 = vmatprep.subr.mxu0 0.0
    %795 = vmatpush1.msra.mxu0 0.0
    %796 = vmatprep.subr.mxu0 0.0
    %797 = vmatpush1.msra.mxu0 0.0
    %798 = vmatprep.mubr.f32.mxu0 0.0
    %799 = vmatmul.mubr.f32.gmra.mrb[0].mxu0 %v729
    %v800 = vpop.f32.mrb[0].mxu0
    %v801 = vadd.f32 %v726, %v800
    %v802 = vpop.f32.mrb[0].mxu0
    %803 = vmatprep.mubr.f32.mxu0 0.0
    %804 = vmatmul.mubr.f32.gmra.mrb[0].mxu0 %v732
    %v805 = vpop.f32.mrb[0].mxu0
    %v806 = vadd.f32 %v726, %v805
    %v807 = vpop.f32.mrb[0].mxu0
    %808 = vdwg.mxu0
    %809 = vst.msk [vmem:[#allocation2] sm:$0xff] %vm52, %v801
    %810 = vst.msk [vmem:[#allocation2 + $0x8] sm:$0xff] %vm52, %v806
    // Predicated region
    $region58: #{mamba_block.1} parent=1 // pred_check
      _
    $region59: #{mamba_block.1} parent=1 // pred_check_branch
      %812 = sbr.rel (0) target = $region61
    $region60: #{mamba_block.1} parent=1 // pred_region
      %s814 = ssub.s32 256, 256
      %815 = vsyncadd [#allocation3], %s814
      %s816 = sshll.u32 [#allocation2], 4
      %s817 = int_to_ptr.vmem [resolvable:$true] %s816
      %822 = dma.vmem_to_hbm [thread:$0]  %s817, 256, %s14, [#allocation3], 128, 128, 8
    $region61: #{mamba_block.1} parent=1 // pred_fallthru
      _
    // Predicated region
    $region62: #{mamba_block.1} parent=1 // pred_check
      _
    $region63: #{mamba_block.1} parent=1 // pred_check_branch
      %824 = sbr.rel (0) target = $region65
    $region64: #{mamba_block.1} parent=1 // pred_region
      %825 = dma.done [#allocation3], 256
    $region65: #{mamba_block.1} parent=1 // pred_fallthru
      _
    %826 = vsyncpa [#allocation3], 1

</llo_original>
